<compile_context>
chip_gen: v5e
topology: v5e:2x2
jax: 0.10.0
libtpu: 0.0.40
codegen_flags: <defaults>
</compile_context>

<pallas_src>
import functools
import math

import jax
import jax.numpy as jnp
from jax.experimental import pallas as pl
from jax.experimental.pallas import tpu as pltpu

NUM_TOKENS = 10
_TWO_PI = 2.0 * math.pi
_INV_2_23 = 1.0 / float(1 << 23)
_GOLDEN = 0x9E3779B9       # seed mixing constant
_MAX_TILE_ROWS = 2048      # 1 MiB f32 per block (~2 MiB double-buffered)


def _cdiv(a, b):
    return -(-a // b)


def _round_up(a, m):
    return _cdiv(a, m) * m


def _hash_u32(x):
    """lowbias32 integer hash: uint32 -> well-mixed uint32 (VPU-only ops)."""
    x = x ^ (x >> 16)
    x = x * jnp.uint32(0x7FEB352D)
    x = x ^ (x >> 15)
    x = x * jnp.uint32(0x846CA68B)
    x = x ^ (x >> 16)
    return x


def _bits_to_unit_open(bits):
    """uint32 bits -> float32 uniform strictly inside (0, 1)."""
    m = (bits >> 9).astype(jnp.int32).astype(jnp.float32)  # 23 bits, < 2^23
    return (m + 0.5) * _INV_2_23


def _randn_kernel(seed_ref, out_ref, *, trans_dtype):
    """Fill the (tile, 128) output tile with N(0, 1) samples.

    Counter-based PRNG + full Box-Muller (both cos and sin branches); the
    transcendentals run in `trans_dtype` (bf16 on v6e/v7x, f32 on v5e).
    """
    tile_rows, cols = out_ref.shape  # static
    half = tile_rows // 2

    i = pl.program_id(0)
    seed_mix = seed_ref[0].astype(jnp.uint32) * jnp.uint32(_GOLDEN)

    # Global pair index for each element of the half-tile, built in uint32.
    tile_base = i.astype(jnp.uint32) * jnp.uint32(half * cols)
    row = jax.lax.broadcasted_iota(jnp.int32, (half, cols), 0).astype(jnp.uint32)
    col = jax.lax.broadcasted_iota(jnp.int32, (half, cols), 1).astype(jnp.uint32)
    pair = tile_base + row * jnp.uint32(cols) + col
    base = pair * jnp.uint32(2) + seed_mix

    # Two independent uniform streams per pair (f32).
    u1 = _bits_to_unit_open(_hash_u32(base))
    u2 = _bits_to_unit_open(_hash_u32(base + jnp.uint32(1)))

    # Box-Muller: both outputs are independent standard normals.
    # Transcendentals in trans_dtype (EUP-bound), upcast + multiply in f32.
    r = jnp.sqrt(-2.0 * jnp.log(u1.astype(trans_dtype))).astype(jnp.float32)
    theta = (_TWO_PI * u2).astype(trans_dtype)
    cos_t = jnp.cos(theta).astype(jnp.float32)
    sin_t = jnp.sin(theta).astype(jnp.float32)

    out_ref[0:half, :] = r * cos_t
    out_ref[half:tile_rows, :] = r * sin_t


def _use_bf16_transcendentals():
    """bf16 EUP path on v6e/v7x; keep f32 on v5e (no bf16 EUP) or unknown."""
    try:
        kind = jax.devices()[0].device_kind.lower()
    except Exception:
        return False
    return any(tag in kind for tag in ("v6", "v7", "7x"))


def _pick_tiling(rows16):
    """Return (tile_rows, grid) for a (rows16, 128) slab.

    tile ~= rows16 / n with n = max(2, cdiv(rows16, MAX)), rounded up to a
    multiple of 16 (so the Box-Muller half-split stays sublane-aligned).
    Padding waste is <= ~16 rows per grid step; grid >= 2 whenever rows16>=32
    so both v7x TensorCores get work.
    """
    if rows16 <= 16:
        return rows16, 1
    n = max(2, _cdiv(rows16, _MAX_TILE_ROWS))
    tile = min(_MAX_TILE_ROWS, _round_up(_cdiv(rows16, n), 16))
    tile = max(16, tile)
    grid = _cdiv(rows16, tile)
    return tile, grid


def _make_linear_params():
    """Deterministic stand-in for torch.nn.Linear(10, 10) params (unused in forward)."""
    w_key, b_key = jax.random.split(jax.random.PRNGKey(42))
    bound = 1.0 / math.sqrt(10.0)
    weight = jax.random.uniform(w_key, (10, 10), jnp.float32, -bound, bound)
    bias = jax.random.uniform(b_key, (10,), jnp.float32, -bound, bound)
    return {"weight": weight, "bias": bias}


def mock_model_forward(params, x, t, clue_mask, *, seed=0):
    """Pallas equivalent of MockModel.forward: returns randn(B, 9, 9, 10)."""
    del params, t, clue_mask  # forward only uses x's batch dimension
    batch = x.shape[0]
    total = batch * 9 * 9 * NUM_TOKENS

    cols = 128
    rows = _cdiv(total, cols)
    rows16 = _round_up(rows, 16)          # even multiple of 8 (f32 sublanes)
    tile, grid = _pick_tiling(rows16)
    rows_out = tile * grid                # full coverage; tiny (<=16*grid row) pad

    trans_dtype = jnp.bfloat16 if _use_bf16_transcendentals() else jnp.float32
    kernel = functools.partial(_randn_kernel, trans_dtype=trans_dtype)

    seed_arr = jnp.asarray([seed], dtype=jnp.int32)

    slab = pl.pallas_call(
        kernel,
        out_shape=jax.ShapeDtypeStruct((rows_out, cols), jnp.float32),
        grid=(grid,),
        in_specs=[pl.BlockSpec(memory_space=pltpu.MemorySpace.SMEM)],
        out_specs=pl.BlockSpec((tile, cols), lambda i: (i, 0)),
        compiler_params=pltpu.CompilerParams(
            dimension_semantics=("parallel",)),
    )(seed_arr)

    flat = slab.reshape(-1)[:total]
    return flat.reshape(batch, 9, 9, NUM_TOKENS)


if __name__ == "__main__":
    key = jax.random.PRNGKey(0)
    kx, kt, kc = jax.random.split(key, 3)

    batch = 2
    # Input shapes consistent with a board-of-81-cells / 10-token model;
    # only x.shape[0] actually matters to the forward pass.
    x = jax.random.normal(kx, (batch, 81, NUM_TOKENS), dtype=jnp.float32)
    t = jax.random.uniform(kt, (batch,), dtype=jnp.float32)
    clue_mask = (jax.random.uniform(kc, (batch, 81)) > 0.5).astype(jnp.float32)

    params = _make_linear_params()

    out = mock_model_forward(params, x, t, clue_mask, seed=0)
    out = jax.block_until_ready(out)

    assert out.shape == (batch, 9, 9, NUM_TOKENS), out.shape
    assert out.dtype == jnp.float32, out.dtype
    assert bool(jnp.all(jnp.isfinite(out)))
    # Loose sanity check that samples look standard-normal-ish.
    m = float(jnp.mean(out))
    s = float(jnp.std(out))
    assert abs(m) < 0.3 and 0.5 < s < 1.5, (m, s)
    print("KERNEL_OK")
</pallas_src>

<mosaic_0001>
module attributes {stable_mosaic.version = 11 : i64} {
  func.func @_randn_kernel(%arg0: i32, %arg1: memref<1xi32, #tpu.memory_space<smem>>, %arg2: memref<16x128xf32, #tpu.memory_space<vmem>>) attributes {dimension_semantics = [#tpu.dimension_semantics<parallel>], iteration_bounds = array<i64: 1>, scalar_prefetch = 0 : i64, scratch_operands = 0 : i64, tpu.core_type = #tpu.core_type<tc>, window_params = [{transform_indices = @transform_0, window_bounds = array<i64: 1>}, {transform_indices = @transform_1, window_bounds = array<i64: 16, 128>}]} {
    %c0 = arith.constant 0 : index
    %0 = memref.load %arg1[%c0] : memref<1xi32, #tpu.memory_space<smem>>
    %c-1640531527_i32 = arith.constant -1640531527 : i32
    %1 = arith.muli %0, %c-1640531527_i32 : i32
    %c1024_i32 = arith.constant 1024 : i32
    %2 = arith.muli %arg0, %c1024_i32 : i32
    %3 = tpu.iota {dimensions = array<i32: 0>} : vector<8x128xi32>
    %4 = tpu.iota {dimensions = array<i32: 1>} : vector<8x128xi32>
    %c128_i32 = arith.constant 128 : i32
    %5 = vector.broadcast %c128_i32 : i32 to vector<8x128xi32>
    %6 = arith.muli %3, %5 : vector<8x128xi32>
    %7 = vector.broadcast %2 : i32 to vector<8x128xi32>
    %8 = arith.addi %7, %6 : vector<8x128xi32>
    %9 = arith.addi %8, %4 : vector<8x128xi32>
    %c2_i32 = arith.constant 2 : i32
    %10 = vector.broadcast %c2_i32 : i32 to vector<8x128xi32>
    %11 = arith.muli %9, %10 : vector<8x128xi32>
    %12 = vector.broadcast %1 : i32 to vector<8x128xi32>
    %13 = arith.addi %11, %12 : vector<8x128xi32>
    %c16_i32 = arith.constant 16 : i32
    %14 = vector.broadcast %c16_i32 : i32 to vector<8x128xi32>
    %15 = arith.shrui %13, %14 : vector<8x128xi32>
    %16 = arith.xori %13, %15 : vector<8x128xi32>
    %c2146121005_i32 = arith.constant 2146121005 : i32
    %17 = vector.broadcast %c2146121005_i32 : i32 to vector<8x128xi32>
    %18 = arith.muli %16, %17 : vector<8x128xi32>
    %c15_i32 = arith.constant 15 : i32
    %19 = vector.broadcast %c15_i32 : i32 to vector<8x128xi32>
    %20 = arith.shrui %18, %19 : vector<8x128xi32>
    %21 = arith.xori %18, %20 : vector<8x128xi32>
    %c-2073254261_i32 = arith.constant -2073254261 : i32
    %22 = vector.broadcast %c-2073254261_i32 : i32 to vector<8x128xi32>
    %23 = arith.muli %21, %22 : vector<8x128xi32>
    %c16_i32_0 = arith.constant 16 : i32
    %24 = vector.broadcast %c16_i32_0 : i32 to vector<8x128xi32>
    %25 = arith.shrui %23, %24 : vector<8x128xi32>
    %26 = arith.xori %23, %25 : vector<8x128xi32>
    %c9_i32 = arith.constant 9 : i32
    %27 = vector.broadcast %c9_i32 : i32 to vector<8x128xi32>
    %28 = arith.shrui %26, %27 : vector<8x128xi32>
    %29 = arith.sitofp %28 : vector<8x128xi32> to vector<8x128xf32>
    %cst = arith.constant 5.000000e-01 : f32
    %30 = vector.broadcast %cst : f32 to vector<8x128xf32>
    %31 = arith.addf %29, %30 : vector<8x128xf32>
    %cst_1 = arith.constant 1.1920929E-7 : f32
    %32 = vector.broadcast %cst_1 : f32 to vector<8x128xf32>
    %33 = arith.mulf %31, %32 : vector<8x128xf32>
    %c1_i32 = arith.constant 1 : i32
    %34 = vector.broadcast %c1_i32 : i32 to vector<8x128xi32>
    %35 = arith.addi %13, %34 : vector<8x128xi32>
    %c16_i32_2 = arith.constant 16 : i32
    %36 = vector.broadcast %c16_i32_2 : i32 to vector<8x128xi32>
    %37 = arith.shrui %35, %36 : vector<8x128xi32>
    %38 = arith.xori %35, %37 : vector<8x128xi32>
    %c2146121005_i32_3 = arith.constant 2146121005 : i32
    %39 = vector.broadcast %c2146121005_i32_3 : i32 to vector<8x128xi32>
    %40 = arith.muli %38, %39 : vector<8x128xi32>
    %c15_i32_4 = arith.constant 15 : i32
    %41 = vector.broadcast %c15_i32_4 : i32 to vector<8x128xi32>
    %42 = arith.shrui %40, %41 : vector<8x128xi32>
    %43 = arith.xori %40, %42 : vector<8x128xi32>
    %c-2073254261_i32_5 = arith.constant -2073254261 : i32
    %44 = vector.broadcast %c-2073254261_i32_5 : i32 to vector<8x128xi32>
    %45 = arith.muli %43, %44 : vector<8x128xi32>
    %c16_i32_6 = arith.constant 16 : i32
    %46 = vector.broadcast %c16_i32_6 : i32 to vector<8x128xi32>
    %47 = arith.shrui %45, %46 : vector<8x128xi32>
    %48 = arith.xori %45, %47 : vector<8x128xi32>
    %c9_i32_7 = arith.constant 9 : i32
    %49 = vector.broadcast %c9_i32_7 : i32 to vector<8x128xi32>
    %50 = arith.shrui %48, %49 : vector<8x128xi32>
    %51 = arith.sitofp %50 : vector<8x128xi32> to vector<8x128xf32>
    %cst_8 = arith.constant 5.000000e-01 : f32
    %52 = vector.broadcast %cst_8 : f32 to vector<8x128xf32>
    %53 = arith.addf %51, %52 : vector<8x128xf32>
    %cst_9 = arith.constant 1.1920929E-7 : f32
    %54 = vector.broadcast %cst_9 : f32 to vector<8x128xf32>
    %55 = arith.mulf %53, %54 : vector<8x128xf32>
    %56 = math.log %33 : vector<8x128xf32>
    %cst_10 = arith.constant -2.000000e+00 : f32
    %57 = vector.broadcast %cst_10 : f32 to vector<8x128xf32>
    %58 = arith.mulf %57, %56 : vector<8x128xf32>
    %59 = math.sqrt %58 : vector<8x128xf32>
    %cst_11 = arith.constant 6.28318548 : f32
    %60 = vector.broadcast %cst_11 : f32 to vector<8x128xf32>
    %61 = arith.mulf %60, %55 : vector<8x128xf32>
    %62 = math.cos %61 : vector<8x128xf32>
    %63 = math.sin %61 : vector<8x128xf32>
    %64 = arith.mulf %59, %62 : vector<8x128xf32>
    %c0_12 = arith.constant 0 : index
    %c0_13 = arith.constant 0 : index
    %65 = vector.load %arg2[%c0_12, %c0_13] : memref<16x128xf32, #tpu.memory_space<vmem>>, vector<8x128xf32>
    tpu.vector_store %arg2[%c0_12, %c0_13], %64 {strides = array<i32>} : memref<16x128xf32, #tpu.memory_space<vmem>>, vector<8x128xf32>,
    %66 = arith.mulf %59, %63 : vector<8x128xf32>
    %c8 = arith.constant 8 : index
    %c0_14 = arith.constant 0 : index
    %67 = vector.load %arg2[%c8, %c0_14] : memref<16x128xf32, #tpu.memory_space<vmem>>, vector<8x128xf32>
    tpu.vector_store %arg2[%c8, %c0_14], %66 {strides = array<i32>} : memref<16x128xf32, #tpu.memory_space<vmem>>, vector<8x128xf32>,
    return
  }
  func.func @transform_0(%arg0: i32) -> i32 {
    %c0_i32 = arith.constant 0 : i32
    %c0_i32_0 = arith.constant 0 : i32
    return %c0_i32 : i32
  }
  func.func @transform_1(%arg0: i32) -> (i32, i32) {
    %c0_i32 = arith.constant 0 : i32
    %c0_i32_0 = arith.constant 0 : i32
    return %arg0, %c0_i32 : i32, i32
  }
}

</mosaic_0001>

<llo_original>
// kernel: tpu_custom_call.1
$region0: #{tpu_custom_call.1}
  #allocation0 [shape = 'u32[]', space=smem, size = 0x4, offset = 0x4, fixed_abs, tag = 'smem constant byte address 0x4 - core index']
  #allocation1 [shape = 'u32[72,128]{1,0:T(1,128)}', space=vmem, size = 0x9000, scoped, tag = 'internal scratch']
  #allocation2 [shape = 's32[1]{0:T(128)S(6)}', space=smem, size = 0x200, scoped, tag = 'scoped memory for tpu_custom_call.1']
  %s0 = inlined_call_operand.<no memory space> [shape: s32[1], index: 0, kind: input, shape index: {}]
  %s1 = inlined_call_operand.hbm [shape: f32[16,128], index: 1, kind: output, shape index: {}]
  %s2 = sld [smem:[#allocation0]]
  $region14: #{tpu_custom_call.1} parent=0
    _
  %s4 = ssub.s32 1, %s2
  %s5 = scalar_select 0, %s4, %s2
  %6 = sst [smem:[#allocation2]] %s0
  $region1: #{tpu_custom_call.1} parent=0
    #allocation3 [shape = 'u8[8192]{0}', space=vmem, size = 0x2000, scoped, tag = 'output window, operand 0, single buffered']
    #allocation4 [shape = 's32[1]{0}', space=sflag, size = 0x4, scoped, tag = 'scoped memory for tpu_custom_call.1']
    %7 = vsyncpa [#allocation4], 0
    // Predicated region
    $region2: #{tpu_custom_call.1} parent=1 // pred_check
      _
    $region3: #{tpu_custom_call.1} parent=1 // pred_check_branch
      %9 = sbr.rel (0) target = $region5
    $region4: #{tpu_custom_call.1} parent=1 // pred_region
      _
    $region5: #{tpu_custom_call.1} parent=1 // pred_fallthru
      _
    %s10 = sld [smem:[#allocation2]]
    %s11 = smul.u32 %s10, 2654435769
    %s12 = smul.u32 0, 1024
    %v13 = vlaneseq
    %v14 = vshrl.u32 %v13, 7
    %v15 = vlaneseq
    %v16 = vand.u32 %v15, 127
    %v17 = vmul.u32 %v14, 128
    %v18 = vstv %s12
    %v19 = vadd.s32 %v18, %v17
    %v20 = vadd.s32 %v19, %v16
    %v21 = vmul.u32 %v20, 2
    %v22 = vstv %s11
    %v23 = vadd.s32 %v21, %v22
    %v24 = vshrl.u32 %v23, 16
    %v25 = vxor.u32 %v23, %v24
    %v26 = vmul.u32 %v25, 2146121005
    %v27 = vshrl.u32 %v26, 15
    %v28 = vxor.u32 %v26, %v27
    %v29 = vmul.u32 %v28, 2221713035
    %v30 = vshrl.u32 %v29, 16
    %v31 = vxor.u32 %v29, %v30
    %v32 = vshrl.u32 %v31, 9
    %v33 = vcvt.s32.f32 %v32
    %v34 = vadd.f32 %v33, 0.5
    %v35 = vmul.f32 %v34, 1.1920929e-07
    %v36 = vadd.s32 %v23, 1
    %v37 = vshrl.u32 %v36, 16
    %v38 = vxor.u32 %v36, %v37
    %v39 = vmul.u32 %v38, 2146121005
    %v40 = vshrl.u32 %v39, 15
    %v41 = vxor.u32 %v39, %v40
    %v42 = vmul.u32 %v41, 2221713035
    %v43 = vshrl.u32 %v42, 16
    %v44 = vxor.u32 %v42, %v43
    %v45 = vshrl.u32 %v44, 9
    %v46 = vcvt.s32.f32 %v45
    %v47 = vadd.f32 %v46, 0.5
    %v48 = vmul.f32 %v47, 1.1920929e-07
    %v49 = vlog2.pop %v35
    %v50 = vmul.f32 %v49, 0.6931472
    %v51 = vmul.f32 %v50, -2.0
    %v52 = vrsqrt.pop %v51
    %v53 = vmul.f32 %v52, %v51
    %v54 = vmul.f32 %v53, %v52
    %v55 = vmul.f32 0.5, %v54
    %v56 = vsub.f32 1.5, %v55
    %v57 = vmul.f32 %v52, %v56
    %v58 = vmul.f32 %v51, %v57
    %vm59 = vcmp.eq.f32.partialorder %v51, inf
    %v60 = vsel %vm59, %v51, %v58
    %vm61 = vcmp.eq.f32.partialorder %v51, 0.0
    %v62 = vand.u32 %v51, 2147483648
    %v63 = vsel %vm61, %v62, %v60
    %v64 = vmul.f32 %v48, 6.2831855
    %v65 = vand.u32 2147483647, %v64
    %vm66 = vcmp.le.f32.partialorder %v65, 0.7853982
    %vm67 = vcmp.lt.s32.totalorder %v64, 0
    %v68 = vand.u32 %v64, 2139095040
    %v69 = vshrl.u32 %v68, 23
    %v70 = vsub.s32 %v69, 127
    %v71 = vand.u32 2147483647, %v64
    %v72 = vand.u32 %v71, 8388607
    %v73 = vor.u32 %v72, 8388608
    %v74 = vsub.s32 0, %v73
    %v75 = vadd.s32 %v70, 1
    %vm76 = vcmp.gt.s32.totalorder %v75, 0
    %v77 = vsel %vm76, %v75, 0
    %v78 = vshrl.u32 %v77, 5
    %v79 = vand.u32 %v77, 31
    %v80 = vsub.s32 32, %v79
    %v81 = vshrl.u32 683565275, %v80
    %v82 = vshll.u32 683565275, %v79
    %v83 = vshrl.u32 2475754826, %v80
    %v84 = vor.u32 %v82, %v83
    %v85 = vshll.u32 2475754826, %v79
    %v86 = vshrl.u32 2131351028, %v80
    %v87 = vor.u32 %v85, %v86
    %v88 = vshll.u32 2131351028, %v79
    %v89 = vshrl.u32 2102212464, %v80
    %v90 = vor.u32 %v88, %v89
    %v91 = vshll.u32 2102212464, %v79
    %v92 = vshrl.u32 920167782, %v80
    %v93 = vor.u32 %v91, %v92
    %v94 = vshll.u32 920167782, %v79
    %v95 = vshrl.u32 1326507024, %v80
    %v96 = vor.u32 %v94, %v95
    %vm97 = vcmp.lt.s32.totalorder %v78, 1
    %vm98 = vcmp.lt.s32.totalorder %v78, 2
    %vm99 = vcmp.lt.s32.totalorder %v78, 3
    %vm100 = vcmp.lt.s32.totalorder %v78, 4
    %v101 = vsel %vm97, %v81, %v84
    %v102 = vsel %vm100, %v90, 2102212464
    %v103 = vsel %vm99, %v87, %v102
    %v104 = vsel %vm98, %v101, %v103
    %v105 = vsel %vm97, %v84, %v87
    %v106 = vsel %vm100, %v93, 920167782
    %v107 = vsel %vm99, %v90, %v106
    %v108 = vsel %vm98, %v105, %v107
    %v109 = vsel %vm97, %v87, %v90
    %v110 = vsel %vm100, %v96, 1326507024
    %v111 = vsel %vm99, %v93, %v110
    %v112 = vsel %vm98, %v109, %v111
    %v113 = vshll.u32 %v73, 8
    %v114 = vand.u32 %v113, 65535
    %v115 = vshrl.u32 %v113, 16
    %v116 = vand.u32 %v112, 65535
    %v117 = vshrl.u32 %v112, 16
    %v118 = vmul.u32 %v114, %v116
    %v119 = vmul.u32 %v114, %v117
    %v120 = vmul.u32 %v115, %v116
    %v121 = vmul.u32 %v115, %v117
    %v122 = vshll.u32 %v119, 16
    %v123 = vshrl.u32 %v119, 16
    %v124 = vshll.u32 %v120, 16
    %v125 = vshrl.u32 %v120, 16
    %vm126 = vc.u32 %v118, %v122
    %v127 = vsel %vm126, 1, 0
    %v128 = vadd.s32 %v118, %v122
    %v129 = vadd.s32 %v121, %v127
    %vm130 = vc.u32 %v128, %v124
    %v131 = vsel %vm130, 1, 0
    %v132 = vadd.s32 %v128, %v124
    %v133 = vadd.s32 %v129, %v131
    %v134 = vadd.s32 %v133, %v123
    %v135 = vadd.s32 %v134, %v125
    %v136 = vand.u32 %v113, 65535
    %v137 = vshrl.u32 %v113, 16
    %v138 = vand.u32 %v108, 65535
    %v139 = vshrl.u32 %v108, 16
    %v140 = vmul.u32 %v136, %v138
    %v141 = vmul.u32 %v136, %v139
    %v142 = vmul.u32 %v137, %v138
    %v143 = vmul.u32 %v137, %v139
    %v144 = vshll.u32 %v141, 16
    %v145 = vshrl.u32 %v141, 16
    %v146 = vshll.u32 %v142, 16
    %v147 = vshrl.u32 %v142, 16
    %vm148 = vc.u32 %v140, %v144
    %v149 = vsel %vm148, 1, 0
    %v150 = vadd.s32 %v140, %v144
    %v151 = vadd.s32 %v143, %v149
    %vm152 = vc.u32 %v150, %v146
    %v153 = vsel %vm152, 1, 0
    %v154 = vadd.s32 %v150, %v146
    %v155 = vadd.s32 %v151, %v153
    %v156 = vadd.s32 %v155, %v145
    %v157 = vadd.s32 %v156, %v147
    %v158 = vmul.u32 %v113, %v104
    %v159 = vadd.s32 %v135, %v154
    %vm160 = vc.u32 %v135, %v154
    %v161 = vadd.s32 %v157, 1
    %v162 = vsel %vm160, %v161, %v157
    %v163 = vadd.s32 %v158, %v162
    %v164 = vadd.s32 %v163, 536870912
    %v165 = vshrl.u32 %v164, 30
    %v166 = vshll.u32 %v165, 30
    %v167 = vsub.s32 %v163, %v166
    %vm168 = vcmp.lt.s32.totalorder %v167, 0
    %v169 = vsub.s32 0, %v167
    %v170 = vsel %vm168, %v169, %v167
    %v171 = vclz %v170
    %v172 = vsub.s32 %v171, 2
    %vm173 = vcmp.gt.s32.totalorder 0, %v172
    %v174 = vsel %vm173, 0, %v172
    %v175 = vsub.s32 32, %v174
    %v176 = vshll.u32 %v167, %v174
    %v177 = vshrl.u32 %v159, %v175
    %v178 = vor.u32 %v176, %v177
    %v179 = vsub.s32 4294967266, %v174
    %v180 = vadd.s32 %v179, 127
    %v181 = vshll.u32 %v180, 23
    %v182 = vor.u32 4788187, %v181
    %v183 = vand.u32 2147483647, %v182
    %v185 = vcvt.s32.f32 %v178
    %v186 = vmul.f32 %v185, %v183
    %v187 = vxor.u32 %v186, 2147483648
    %v188 = vsel %vm67, %v187, %v186
    %v189 = vsub.s32 4, %v165
    %v190 = vsel %vm67, %v189, %v165
    %v191 = vsel %vm66, %v64, %v188
    %v192 = vsel %vm66, 0, %v190
    %v193 = vmul.f32 %v191, %v191
    %v194 = vmul.f32 %v193, -0.001358992
    %v195 = vadd.f32 %v194, 0.041655596
    %v196 = vmul.f32 %v193, %v195
    %v197 = vadd.f32 %v196, -0.4999988
    %v198 = vmul.f32 %v193, %v197
    %v199 = vadd.f32 1.0, %v198
    %v200 = vmul.f32 %v191, %v191
    %v201 = vmul.f32 %v200, -0.00019511016
    %v202 = vadd.f32 %v201, 0.008332121
    %v203 = vmul.f32 %v200, %v202
    %v204 = vadd.f32 %v203, -0.16666654
    %v205 = vmul.f32 %v200, %v204
    %v206 = vadd.f32 %v205, 1.0
    %v207 = vmul.f32 %v206, %v191
    %vm208 = vweird.f32 %v64
    %v209 = vand.u32 %v192, 3
    %vm210 = vcmp.lt.s32.totalorder %v209, 2
    %vm211 = vcmp.eq.s32.totalorder %v209, 0
    %v212 = vxor.u32 %v207, 2147483648
    %v213 = vsel %vm211, %v199, %v212
    %vm214 = vcmp.eq.s32.totalorder %v209, 2
    %v215 = vxor.u32 %v199, 2147483648
    %v216 = vsel %vm214, %v215, %v207
    %v217 = vsel %vm210, %v213, %v216
    %v218 = vsel %vm208, nan, %v217
    %v219 = vand.u32 2147483647, %v64
    %vm220 = vcmp.le.f32.partialorder %v219, 0.7853982
    %vm221 = vcmp.lt.s32.totalorder %v64, 0
    %v222 = vand.u32 %v64, 2139095040
    %v223 = vshrl.u32 %v222, 23
    %v224 = vsub.s32 %v223, 127
    %v225 = vand.u32 2147483647, %v64
    %v226 = vand.u32 %v225, 8388607
    %v227 = vor.u32 %v226, 8388608
    %v228 = vsub.s32 0, %v227
    %v229 = vadd.s32 %v224, 1
    %vm230 = vcmp.gt.s32.totalorder %v229, 0
    %v231 = vsel %vm230, %v229, 0
    %v232 = vshrl.u32 %v231, 5
    %v233 = vand.u32 %v231, 31
    %v234 = vsub.s32 32, %v233
    %v235 = vshrl.u32 683565275, %v234
    %v236 = vshll.u32 683565275, %v233
    %v237 = vshrl.u32 2475754826, %v234
    %v238 = vor.u32 %v236, %v237
    %v239 = vshll.u32 2475754826, %v233
    %v240 = vshrl.u32 2131351028, %v234
    %v241 = vor.u32 %v239, %v240
    %v242 = vshll.u32 2131351028, %v233
    %v243 = vshrl.u32 2102212464, %v234
    %v244 = vor.u32 %v242, %v243
    %v245 = vshll.u32 2102212464, %v233
    %v246 = vshrl.u32 920167782, %v234
    %v247 = vor.u32 %v245, %v246
    %v248 = vshll.u32 920167782, %v233
    %v249 = vshrl.u32 1326507024, %v234
    %v250 = vor.u32 %v248, %v249
    %vm251 = vcmp.lt.s32.totalorder %v232, 1
    %vm252 = vcmp.lt.s32.totalorder %v232, 2
    %vm253 = vcmp.lt.s32.totalorder %v232, 3
    %vm254 = vcmp.lt.s32.totalorder %v232, 4
    %v255 = vsel %vm251, %v235, %v238
    %v256 = vsel %vm254, %v244, 2102212464
    %v257 = vsel %vm253, %v241, %v256
    %v258 = vsel %vm252, %v255, %v257
    %v259 = vsel %vm251, %v238, %v241
    %v260 = vsel %vm254, %v247, 920167782
    %v261 = vsel %vm253, %v244, %v260
    %v262 = vsel %vm252, %v259, %v261
    %v263 = vsel %vm251, %v241, %v244
    %v264 = vsel %vm254, %v250, 1326507024
    %v265 = vsel %vm253, %v247, %v264
    %v266 = vsel %vm252, %v263, %v265
    %v267 = vshll.u32 %v227, 8
    %v268 = vand.u32 %v267, 65535
    %v269 = vshrl.u32 %v267, 16
    %v270 = vand.u32 %v266, 65535
    %v271 = vshrl.u32 %v266, 16
    %v272 = vmul.u32 %v268, %v270
    %v273 = vmul.u32 %v268, %v271
    %v274 = vmul.u32 %v269, %v270
    %v275 = vmul.u32 %v269, %v271
    %v276 = vshll.u32 %v273, 16
    %v277 = vshrl.u32 %v273, 16
    %v278 = vshll.u32 %v274, 16
    %v279 = vshrl.u32 %v274, 16
    %vm280 = vc.u32 %v272, %v276
    %v281 = vsel %vm280, 1, 0
    %v282 = vadd.s32 %v272, %v276
    %v283 = vadd.s32 %v275, %v281
    %vm284 = vc.u32 %v282, %v278
    %v285 = vsel %vm284, 1, 0
    %v286 = vadd.s32 %v282, %v278
    %v287 = vadd.s32 %v283, %v285
    %v288 = vadd.s32 %v287, %v277
    %v289 = vadd.s32 %v288, %v279
    %v290 = vand.u32 %v267, 65535
    %v291 = vshrl.u32 %v267, 16
    %v292 = vand.u32 %v262, 65535
    %v293 = vshrl.u32 %v262, 16
    %v294 = vmul.u32 %v290, %v292
    %v295 = vmul.u32 %v290, %v293
    %v296 = vmul.u32 %v291, %v292
    %v297 = vmul.u32 %v291, %v293
    %v298 = vshll.u32 %v295, 16
    %v299 = vshrl.u32 %v295, 16
    %v300 = vshll.u32 %v296, 16
    %v301 = vshrl.u32 %v296, 16
    %vm302 = vc.u32 %v294, %v298
    %v303 = vsel %vm302, 1, 0
    %v304 = vadd.s32 %v294, %v298
    %v305 = vadd.s32 %v297, %v303
    %vm306 = vc.u32 %v304, %v300
    %v307 = vsel %vm306, 1, 0
    %v308 = vadd.s32 %v304, %v300
    %v309 = vadd.s32 %v305, %v307
    %v310 = vadd.s32 %v309, %v299
    %v311 = vadd.s32 %v310, %v301
    %v312 = vmul.u32 %v267, %v258
    %v313 = vadd.s32 %v289, %v308
    %vm314 = vc.u32 %v289, %v308
    %v315 = vadd.s32 %v311, 1
    %v316 = vsel %vm314, %v315, %v311
    %v317 = vadd.s32 %v312, %v316
    %v318 = vadd.s32 %v317, 536870912
    %v319 = vshrl.u32 %v318, 30
    %v320 = vshll.u32 %v319, 30
    %v321 = vsub.s32 %v317, %v320
    %vm322 = vcmp.lt.s32.totalorder %v321, 0
    %v323 = vsub.s32 0, %v321
    %v324 = vsel %vm322, %v323, %v321
    %v325 = vclz %v324
    %v326 = vsub.s32 %v325, 2
    %vm327 = vcmp.gt.s32.totalorder 0, %v326
    %v328 = vsel %vm327, 0, %v326
    %v329 = vsub.s32 32, %v328
    %v330 = vshll.u32 %v321, %v328
    %v331 = vshrl.u32 %v313, %v329
    %v332 = vor.u32 %v330, %v331
    %v333 = vsub.s32 4294967266, %v328
    %v334 = vadd.s32 %v333, 127
    %v335 = vshll.u32 %v334, 23
    %v336 = vor.u32 4788187, %v335
    %v337 = vand.u32 2147483647, %v336
    %v339 = vcvt.s32.f32 %v332
    %v340 = vmul.f32 %v339, %v337
    %v341 = vxor.u32 %v340, 2147483648
    %v342 = vsel %vm221, %v341, %v340
    %v343 = vsub.s32 4, %v319
    %v344 = vsel %vm221, %v343, %v319
    %v345 = vsel %vm220, %v64, %v342
    %v346 = vsel %vm220, 0, %v344
    %v347 = vmul.f32 %v345, %v345
    %v348 = vmul.f32 %v347, -0.001358992
    %v349 = vadd.f32 %v348, 0.041655596
    %v350 = vmul.f32 %v347, %v349
    %v351 = vadd.f32 %v350, -0.4999988
    %v352 = vmul.f32 %v347, %v351
    %v353 = vadd.f32 1.0, %v352
    %v354 = vmul.f32 %v345, %v345
    %v355 = vmul.f32 %v354, -0.00019511016
    %v356 = vadd.f32 %v355, 0.008332121
    %v357 = vmul.f32 %v354, %v356
    %v358 = vadd.f32 %v357, -0.16666654
    %v359 = vmul.f32 %v354, %v358
    %v360 = vadd.f32 %v359, 1.0
    %v361 = vmul.f32 %v360, %v345
    %vm362 = vweird.f32 %v64
    %v363 = vadd.s32 %v346, 3
    %v364 = vand.u32 %v363, 3
    %vm365 = vcmp.lt.s32.totalorder %v364, 2
    %vm366 = vcmp.eq.s32.totalorder %v364, 0
    %v367 = vxor.u32 %v361, 2147483648
    %v368 = vsel %vm366, %v353, %v367
    %vm369 = vcmp.eq.s32.totalorder %v364, 2
    %v370 = vxor.u32 %v353, 2147483648
    %v371 = vsel %vm369, %v370, %v361
    %v372 = vsel %vm365, %v368, %v371
    %v373 = vsel %vm362, nan, %v372
    %v374 = vmul.f32 %v63, %v218
    %375 = vst [vmem:[#allocation3] sm:$0xff] %v374
    %v376 = vmul.f32 %v63, %v373
    %377 = vst [vmem:[#allocation3 + $0x8] sm:$0xff] %v376
    // Predicated region
    $region6: #{tpu_custom_call.1} parent=1 // pred_check
      _
    $region7: #{tpu_custom_call.1} parent=1 // pred_check_branch
      %379 = sbr.rel (0) target = $region9
    $region8: #{tpu_custom_call.1} parent=1 // pred_region
      %381 = vsyncadd [#allocation4], 0
      %s382 = sshll.u32 [#allocation3], 4
      %s383 = int_to_ptr.vmem [resolvable:$true] %s382
      %s384 = sshll.u32 %s1, 4
      %s385 = int_to_ptr.hbm [resolvable:$true] %s384
      %390 = dma.vmem_to_hbm [thread:$0]  %s383, 256, %s385, [#allocation4], 128, 128, 8
    $region9: #{tpu_custom_call.1} parent=1 // pred_fallthru
      _
    // Predicated region
    $region10: #{tpu_custom_call.1} parent=1 // pred_check
      _
    $region11: #{tpu_custom_call.1} parent=1 // pred_check_branch
      %392 = sbr.rel (0) target = $region13
    $region12: #{tpu_custom_call.1} parent=1 // pred_region
      %394 = dma.done [#allocation4], 256
    $region13: #{tpu_custom_call.1} parent=1 // pred_fallthru
      _
    %395 = vsyncpa [#allocation4], 1

</llo_original>
